<compile_context>
chip_gen: v7x
topology: tpu7x:2x2x1
jax: 0.10.0
libtpu: 0.0.40
codegen_flags: <defaults>
</compile_context>

<pallas_src>
import functools

import jax
import jax.numpy as jnp
from jax.experimental import pallas as pl
from jax.experimental.pallas import tpu as pltpu


def _round_up(x, m):
    return ((x + m - 1) // m) * m


def _cdiv(a, b):
    return (a + b - 1) // b


def _linear_kernel_f32_out(x_ref, w_ref, b_ref, o_ref):
    """float32 output: accumulate directly into the resident output tile."""
    k = pl.program_id(2)

    @pl.when(k == 0)
    def _():
        # Fold the bias into the accumulator init (added exactly once).
        o_ref[...] = jnp.broadcast_to(b_ref[...], o_ref.shape)

    # Canonical [M, K] x [K, N] MXU path (W pre-transposed in the wrapper).
    o_ref[...] += jnp.dot(x_ref[...], w_ref[...],
                          preferred_element_type=jnp.float32)


def _linear_kernel_cast_out(x_ref, w_ref, b_ref, o_ref, acc_ref):
    """Non-f32 output: f32 VMEM accumulator, cast once in the epilogue."""
    k = pl.program_id(2)

    @pl.when(k == 0)
    def _():
        acc_ref[...] = jnp.broadcast_to(b_ref[...], acc_ref.shape)

    acc_ref[...] += jnp.dot(x_ref[...], w_ref[...],
                            preferred_element_type=jnp.float32)

    @pl.when(k == pl.num_programs(2) - 1)
    def _():
        o_ref[...] = acc_ref[...].astype(o_ref.dtype)


@functools.partial(
    jax.jit,
    static_argnames=("tm", "tn", "tk", "compute_dtype", "allow_xla_fast_path"),
)
def linear_regression_forward(x, weight, bias, *, tm=512, tn=512, tk=1024,
                              compute_dtype=None, allow_xla_fast_path=True):
    """Pallas equivalent of torch.nn.Linear(inputSize, outputSize)(x).

    x:      [batch, inputSize]
    weight: [outputSize, inputSize]   (PyTorch Linear convention)
    bias:   [outputSize]
    """
    batch, in_size = x.shape
    out_size, _ = weight.shape
    out_dtype = x.dtype

    # Optional reduced-precision compute path (accumulation stays f32).
    cdt = jnp.dtype(compute_dtype) if compute_dtype is not None else jnp.dtype(out_dtype)
    sublane = 8 * max(1, 4 // cdt.itemsize)   # 8 (f32), 16 (bf16), 32 (int8/fp8)

    # Padded (lane/sublane aligned) problem sizes.
    m_pad = _round_up(batch, sublane)
    n_pad = _round_up(out_size, 128)
    k_pad = _round_up(in_size, 128)

    # Tiny-problem fast path: a single-tile problem cannot beat one fused XLA op.
    if allow_xla_fast_path and m_pad <= tm and n_pad <= tn and k_pad <= tk:
        out = jnp.dot(x, weight.T, preferred_element_type=jnp.float32) + bias
        return out.astype(out_dtype)

    # --- Tile selection -----------------------------------------------------
    # Skinny-output rule: keep the whole weight column panel resident so x is
    # streamed from HBM exactly once.
    tn = n_pad if n_pad <= 512 else min(tn, n_pad)
    tm = min(tm, m_pad)
    # v7x has 2 TensorCores: guarantee >= 2 blocks on the parallel M axis for
    # reasonably sized batches (no effect on single-TC v5e/v6e).
    if m_pad >= 512 and m_pad <= tm:
        tm = _round_up(_cdiv(m_pad, 2), sublane)
    tk = min(tk, k_pad)

    # Balanced re-tiling: derive tile sizes from the block counts so padding
    # waste is minimal, then round padded dims to exact tile multiples.
    nb_m = _cdiv(m_pad, tm)
    tm = _round_up(_cdiv(m_pad, nb_m), sublane)
    m_pad = tm * nb_m
    nb_n = _cdiv(n_pad, tn)
    tn = _round_up(_cdiv(n_pad, nb_n), 128)
    n_pad = tn * nb_n
    nb_k = _cdiv(k_pad, tk)
    tk = _round_up(_cdiv(k_pad, nb_k), 128)
    k_pad = tk * nb_k

    # --- Operand prep (zero padding keeps the contraction exact) ------------
    x_p = jnp.pad(x, ((0, m_pad - batch), (0, k_pad - in_size)))
    # One-time transpose of the (reusable) weights to the canonical [K, N]
    # layout the MXU wants.
    w_p = jnp.pad(weight.T, ((0, k_pad - in_size), (0, n_pad - out_size)))
    b_p = jnp.pad(bias.astype(jnp.float32), (0, n_pad - out_size)).reshape(1, n_pad)

    if compute_dtype is not None:
        x_p = x_p.astype(compute_dtype)
        w_p = w_p.astype(compute_dtype)

    grid = (nb_m, nb_n, nb_k)

    if jnp.dtype(out_dtype) == jnp.float32:
        kernel = _linear_kernel_f32_out
        scratch_shapes = []
        pallas_out_dtype = jnp.float32
    else:
        kernel = _linear_kernel_cast_out
        scratch_shapes = [pltpu.VMEM((tm, tn), jnp.float32)]
        pallas_out_dtype = out_dtype

    out_p = pl.pallas_call(
        kernel,
        out_shape=jax.ShapeDtypeStruct((m_pad, n_pad), pallas_out_dtype),
        grid_spec=pltpu.PrefetchScalarGridSpec(
            num_scalar_prefetch=0,
            grid=grid,
            in_specs=[
                pl.BlockSpec((tm, tk), lambda i, j, k: (i, k)),   # x tile
                pl.BlockSpec((tk, tn), lambda i, j, k: (k, j)),   # W^T tile [K, N]
                pl.BlockSpec((1, tn), lambda i, j, k: (0, j)),    # bias tile
            ],
            out_specs=pl.BlockSpec((tm, tn), lambda i, j, k: (i, j)),
            scratch_shapes=scratch_shapes,
        ),
        compiler_params=pltpu.CompilerParams(
            dimension_semantics=("parallel", "parallel", "arbitrary"),
        ),
    )(x_p, w_p, b_p)

    return out_p[:batch, :out_size].astype(out_dtype)


if __name__ == "__main__":
    key = jax.random.PRNGKey(0)
    kx, kw, kb, kx2, kw2, kb2 = jax.random.split(key, 6)

    ok = True

    # --- Small demo shape consistent with the module (forced Pallas path) ---
    batch, in_size, out_size = 8, 16, 8
    bound = 1.0 / jnp.sqrt(jnp.float32(in_size))
    x = jax.random.normal(kx, (batch, in_size), dtype=jnp.float32)
    weight = jax.random.uniform(kw, (out_size, in_size),
                                minval=-bound, maxval=bound, dtype=jnp.float32)
    bias = jax.random.uniform(kb, (out_size,),
                              minval=-bound, maxval=bound, dtype=jnp.float32)

    out = linear_regression_forward(x, weight, bias, allow_xla_fast_path=False)
    out = jax.block_until_ready(out)
    ref = x @ weight.T + bias
    ok &= out.shape == (batch, out_size)
    ok &= bool(jnp.allclose(out, ref, atol=1e-4, rtol=1e-4))

    # --- Medium shape: exercises multi-block M and K accumulation ----------
    batch2, in2, out2 = 512, 1500, 200
    bound2 = 1.0 / jnp.sqrt(jnp.float32(in2))
    x2 = jax.random.normal(kx2, (batch2, in2), dtype=jnp.float32)
    w2 = jax.random.uniform(kw2, (out2, in2),
                            minval=-bound2, maxval=bound2, dtype=jnp.float32)
    b2 = jax.random.uniform(kb2, (out2,),
                            minval=-bound2, maxval=bound2, dtype=jnp.float32)

    out2_arr = linear_regression_forward(x2, w2, b2, allow_xla_fast_path=False)
    out2_arr = jax.block_until_ready(out2_arr)
    ref2 = x2 @ w2.T + b2
    ok &= out2_arr.shape == (batch2, out2)
    ok &= bool(jnp.allclose(out2_arr, ref2, atol=2e-3, rtol=2e-3))

    if ok:
        print("KERNEL_OK")
    else:
        print("KERNEL_MISMATCH")
</pallas_src>

<mosaic_0001>
module attributes {stable_mosaic.version = 11 : i64} {
  func.func @_linear_kernel_f32_out(%arg0: i32, %arg1: i32, %arg2: i32, %arg3: memref<8x128xf32, #tpu.memory_space<vmem>>, %arg4: memref<128x128xf32, #tpu.memory_space<vmem>>, %arg5: memref<1x128xf32, #tpu.memory_space<vmem>>, %arg6: memref<8x128xf32, #tpu.memory_space<vmem>>) attributes {dimension_semantics = [#tpu.dimension_semantics<parallel>, #tpu.dimension_semantics<parallel>, #tpu.dimension_semantics<arbitrary>], iteration_bounds = array<i64: 1, 1, 1>, scalar_prefetch = 0 : i64, scratch_operands = 0 : i64, tpu.core_type = #tpu.core_type<tc>, window_params = [{transform_indices = @transform_0, window_bounds = array<i64: 8, 128>}, {transform_indices = @transform_1, window_bounds = array<i64: 128, 128>}, {transform_indices = @transform_2, window_bounds = array<i64: 1, 128>}, {transform_indices = @transform_3, window_bounds = array<i64: 8, 128>}]} {
    %c0_i32 = arith.constant 0 : i32
    %0 = arith.cmpi eq, %arg2, %c0_i32 : i32
    %1 = arith.extui %0 : i1 to i32
    %c0_i32_0 = arith.constant 0 : i32
    %2 = arith.cmpi ne, %1, %c0_i32_0 : i32
    scf.if %2 {
      %c0_8 = arith.constant 0 : index
      %c0_9 = arith.constant 0 : index
      %9 = vector.load %arg5[%c0_8, %c0_9] : memref<1x128xf32, #tpu.memory_space<vmem>>, vector<1x128xf32>
      %10 = vector.shape_cast %9 : vector<1x128xf32> to vector<1x128xf32>
      %11 = vector.broadcast %10 : vector<1x128xf32> to vector<8x128xf32>
      %c0_10 = arith.constant 0 : index
      %c0_11 = arith.constant 0 : index
      %12 = vector.load %arg6[%c0_10, %c0_11] : memref<8x128xf32, #tpu.memory_space<vmem>>, vector<8x128xf32>
      tpu.vector_store %arg6[%c0_10, %c0_11], %11 {strides = array<i32>} : memref<8x128xf32, #tpu.memory_space<vmem>>, vector<8x128xf32>,
    } else {
    }
    %c0 = arith.constant 0 : index
    %c0_1 = arith.constant 0 : index
    %3 = vector.load %arg6[%c0, %c0_1] : memref<8x128xf32, #tpu.memory_space<vmem>>, vector<8x128xf32>
    %c0_2 = arith.constant 0 : index
    %c0_3 = arith.constant 0 : index
    %4 = vector.load %arg3[%c0_2, %c0_3] : memref<8x128xf32, #tpu.memory_space<vmem>>, vector<8x128xf32>
    %c0_4 = arith.constant 0 : index
    %c0_5 = arith.constant 0 : index
    %5 = vector.load %arg4[%c0_4, %c0_5] : memref<128x128xf32, #tpu.memory_space<vmem>>, vector<128x128xf32>
    %cst = arith.constant dense<0.000000e+00> : vector<8x128xf32>
    %6 = tpu.matmul %4, %5, %cst {dimension_numbers = #tpu.dot_dimension_numbers<[1], [0], [0], [1], [0, 0, 1, 1], [], []>} : vector<8x128xf32>, vector<128x128xf32>, vector<8x128xf32> -> vector<8x128xf32>
    %7 = arith.addf %3, %6 : vector<8x128xf32>
    %c0_6 = arith.constant 0 : index
    %c0_7 = arith.constant 0 : index
    %8 = vector.load %arg6[%c0_6, %c0_7] : memref<8x128xf32, #tpu.memory_space<vmem>>, vector<8x128xf32>
    tpu.vector_store %arg6[%c0_6, %c0_7], %7 {strides = array<i32>} : memref<8x128xf32, #tpu.memory_space<vmem>>, vector<8x128xf32>,
    return
  }
  func.func @transform_0(%arg0: i32, %arg1: i32, %arg2: i32) -> (i32, i32) {
    %c0_i32 = arith.constant 0 : i32
    return %arg0, %arg2 : i32, i32
  }
  func.func @transform_1(%arg0: i32, %arg1: i32, %arg2: i32) -> (i32, i32) {
    %c0_i32 = arith.constant 0 : i32
    return %arg2, %arg1 : i32, i32
  }
  func.func @transform_2(%arg0: i32, %arg1: i32, %arg2: i32) -> (i32, i32) {
    %c0_i32 = arith.constant 0 : i32
    %c0_i32_0 = arith.constant 0 : i32
    return %c0_i32, %arg1 : i32, i32
  }
  func.func @transform_3(%arg0: i32, %arg1: i32, %arg2: i32) -> (i32, i32) {
    %c0_i32 = arith.constant 0 : i32
    return %arg0, %arg1 : i32, i32
  }
}

</mosaic_0001>

<llo_original>
// kernel: linear_regression_forward.1
$region0: #{linear_regression_forward.1}
  #allocation0 [shape = 'u32[]', space=smem, size = 0x4, offset = 0x4, fixed_abs, tag = 'smem constant byte address 0x4 - core index']
  #allocation1 [shape = 'u32[144,128]{1,0:T(1,128)}', space=vmem, size = 0x12000, scoped, tag = 'internal scratch']
  %s0 = inlined_call_operand.vmem [shape: f32[8,128], index: 0, kind: input, shape index: {}]
  %s1 = inlined_call_operand.vmem [shape: f32[128,128], index: 1, kind: input, shape index: {}]
  %s2 = inlined_call_operand.vmem [shape: f32[1,128], index: 2, kind: input, shape index: {}]
  %s3 = inlined_call_operand.hbm [shape: f32[8,128], index: 3, kind: output, shape index: {}]
  %s4 = sld [smem:[#allocation0]]
  $region26: #{linear_regression_forward.1} parent=0
    _
  %s6 = ssub.s32 1, %s4
  %s7 = scalar_select 0, %s6, %s4
  $region1: #{linear_regression_forward.1} parent=0
    #allocation2 [shape = 'u8[4096]{0}', space=vmem, size = 0x1000, scoped, tag = 'output window, operand 0, single buffered']
    #allocation3 [shape = 's32[1]{0}', space=sflag, size = 0x4, scoped, tag = 'scoped memory for linear_regression_forward.1']
    %8 = vsyncpa [#allocation3], 0
    // Predicated region
    $region2: #{linear_regression_forward.1} parent=1 // pred_check
      _
    $region3: #{linear_regression_forward.1} parent=1 // pred_check_branch
      %10 = sbr.rel (0) target = $region5
    $region4: #{linear_regression_forward.1} parent=1 // pred_region
      _
    $region5: #{linear_regression_forward.1} parent=1 // pred_fallthru
      _
    // Predicated region
    $region6: #{linear_regression_forward.1} parent=1 // pred_check
      _
    $region7: #{linear_regression_forward.1} parent=1 // pred_check_branch
      %12 = sbr.rel (0) target = $region9
    $region8: #{linear_regression_forward.1} parent=1 // pred_region
      _
    $region9: #{linear_regression_forward.1} parent=1 // pred_fallthru
      _
    // Predicated region
    $region10: #{linear_regression_forward.1} parent=1 // pred_check
      _
    $region11: #{linear_regression_forward.1} parent=1 // pred_check_branch
      %14 = sbr.rel (0) target = $region13
    $region12: #{linear_regression_forward.1} parent=1 // pred_region
      _
    $region13: #{linear_regression_forward.1} parent=1 // pred_fallthru
      _
    %p15 = scmp.eq.s32.totalorder 0, 0
    // Predicated region
    $region14: #{linear_regression_forward.1} parent=1 // pred_check
      %p16 = pneg %p15
    $region15: #{linear_regression_forward.1} parent=1 // pred_check_branch
      %18 = sbr.rel (%p16) target = $region17
    $region16: #{linear_regression_forward.1} parent=1 // pred_region
      %v19 = vld [vmem:[%s2] sm:$0x1]
      %v21 = vlaneseq
      %v22 = vshrl.u32 %v21, 7
      %v23 = vsub.s32 0, %v22
      %v24 = vrot.slane %v19, %v23
      %26 = vst [vmem:[#allocation2] sm:$0xff] %v24
    $region17: #{linear_regression_forward.1} parent=1 // pred_fallthru
      _
    %v27 = vld [vmem:[#allocation2] sm:$0xff]
    %v28 = vld [vmem:[%s0] sm:$0xff]
    %v29 = vld [vmem:[%s1] sm:$0xff]
    %v30 = vld [vmem:[%s1 + $0x8] sm:$0xff]
    %v31 = vld [vmem:[%s1 + $0x10] sm:$0xff]
    %v32 = vld [vmem:[%s1 + $0x18] sm:$0xff]
    %v33 = vld [vmem:[%s1 + $0x20] sm:$0xff]
    %v34 = vld [vmem:[%s1 + $0x28] sm:$0xff]
    %v35 = vld [vmem:[%s1 + $0x30] sm:$0xff]
    %v36 = vld [vmem:[%s1 + $0x38] sm:$0xff]
    %v37 = vld [vmem:[%s1 + $0x40] sm:$0xff]
    %v38 = vld [vmem:[%s1 + $0x48] sm:$0xff]
    %v39 = vld [vmem:[%s1 + $0x50] sm:$0xff]
    %v40 = vld [vmem:[%s1 + $0x58] sm:$0xff]
    %v41 = vld [vmem:[%s1 + $0x60] sm:$0xff]
    %v42 = vld [vmem:[%s1 + $0x68] sm:$0xff]
    %v43 = vld [vmem:[%s1 + $0x70] sm:$0xff]
    %v44 = vld [vmem:[%s1 + $0x78] sm:$0xff]
    %45 = vmatprep.subr.mxu0 0.0
    %46 = vmatpush1.msra.mxu0 %v29
    %47 = vmatprep.subr.mxu0 0.0
    %48 = vmatpush1.msra.mxu0 %v30
    %49 = vmatprep.subr.mxu0 0.0
    %50 = vmatpush1.msra.mxu0 %v31
    %51 = vmatprep.subr.mxu0 0.0
    %52 = vmatpush1.msra.mxu0 %v32
    %53 = vmatprep.subr.mxu0 0.0
    %54 = vmatpush1.msra.mxu0 %v33
    %55 = vmatprep.subr.mxu0 0.0
    %56 = vmatpush1.msra.mxu0 %v34
    %57 = vmatprep.subr.mxu0 0.0
    %58 = vmatpush1.msra.mxu0 %v35
    %59 = vmatprep.subr.mxu0 0.0
    %60 = vmatpush1.msra.mxu0 %v36
    %61 = vmatprep.subr.mxu0 0.0
    %62 = vmatpush1.msra.mxu0 %v37
    %63 = vmatprep.subr.mxu0 0.0
    %64 = vmatpush1.msra.mxu0 %v38
    %65 = vmatprep.subr.mxu0 0.0
    %66 = vmatpush1.msra.mxu0 %v39
    %67 = vmatprep.subr.mxu0 0.0
    %68 = vmatpush1.msra.mxu0 %v40
    %69 = vmatprep.subr.mxu0 0.0
    %70 = vmatpush1.msra.mxu0 %v41
    %71 = vmatprep.subr.mxu0 0.0
    %72 = vmatpush1.msra.mxu0 %v42
    %73 = vmatprep.subr.mxu0 0.0
    %74 = vmatpush1.msra.mxu0 %v43
    %75 = vmatprep.subr.mxu0 0.0
    %76 = vmatpush1.msra.mxu0 %v44
    %77 = vmatprep.subr.mxu0 0.0
    %78 = vmatpush1.msra.mxu0 0.0
    %79 = vmatprep.subr.mxu0 0.0
    %80 = vmatpush1.msra.mxu0 0.0
    %81 = vmatprep.subr.mxu0 0.0
    %82 = vmatpush1.msra.mxu0 0.0
    %83 = vmatprep.subr.mxu0 0.0
    %84 = vmatpush1.msra.mxu0 0.0
    %85 = vmatprep.subr.mxu0 0.0
    %86 = vmatpush1.msra.mxu0 0.0
    %87 = vmatprep.subr.mxu0 0.0
    %88 = vmatpush1.msra.mxu0 0.0
    %89 = vmatprep.subr.mxu0 0.0
    %90 = vmatpush1.msra.mxu0 0.0
    %91 = vmatprep.subr.mxu0 0.0
    %92 = vmatpush1.msra.mxu0 0.0
    %93 = vmatprep.subr.mxu0 0.0
    %94 = vmatpush1.msra.mxu0 0.0
    %95 = vmatprep.subr.mxu0 0.0
    %96 = vmatpush1.msra.mxu0 0.0
    %97 = vmatprep.subr.mxu0 0.0
    %98 = vmatpush1.msra.mxu0 0.0
    %99 = vmatprep.subr.mxu0 0.0
    %100 = vmatpush1.msra.mxu0 0.0
    %101 = vmatprep.subr.mxu0 0.0
    %102 = vmatpush1.msra.mxu0 0.0
    %103 = vmatprep.subr.mxu0 0.0
    %104 = vmatpush1.msra.mxu0 0.0
    %105 = vmatprep.subr.mxu0 0.0
    %106 = vmatpush1.msra.mxu0 0.0
    %107 = vmatprep.subr.mxu0 0.0
    %108 = vmatpush1.msra.mxu0 0.0
    %109 = vmatprep.mubr.f32.mxu0 0.0
    %110 = vmatmul.mubr.f32.gmra.mrb[0].mxu0 %v28
    %v111 = vpop.f32.mrb[0].mxu0
    %v112 = vadd.f32 0.0, %v111
    %v113 = vpop.f32.mrb[0].mxu0
    %114 = vdwg.mxu0
    %v115 = vadd.f32 %v27, %v112
    %116 = vst [vmem:[#allocation2] sm:$0xff] %v115
    // Predicated region
    $region18: #{linear_regression_forward.1} parent=1 // pred_check
      _
    $region19: #{linear_regression_forward.1} parent=1 // pred_check_branch
      %118 = sbr.rel (0) target = $region21
    $region20: #{linear_regression_forward.1} parent=1 // pred_region
      %s120 = ssub.s32 128, 128
      %121 = vsyncadd [#allocation3], %s120
      %s123 = sshll.u32 [#allocation2], 4
      %s124 = int_to_ptr.vmem [resolvable:$true] %s123
      %126 = dma.vmem_to_hbm [thread:$0]  %s124, 128, %s3, [#allocation3]
    $region21: #{linear_regression_forward.1} parent=1 // pred_fallthru
      _
    // Predicated region
    $region22: #{linear_regression_forward.1} parent=1 // pred_check
      _
    $region23: #{linear_regression_forward.1} parent=1 // pred_check_branch
      %128 = sbr.rel (0) target = $region25
    $region24: #{linear_regression_forward.1} parent=1 // pred_region
      %129 = dma.done [#allocation3], 128
    $region25: #{linear_regression_forward.1} parent=1 // pred_fallthru
      _
    %130 = vsyncpa [#allocation3], 1

</llo_original>
